<compile_context>
chip_gen: v7x
topology: tpu7x:2x2x1
jax: 0.10.0
libtpu: 0.0.40
codegen_flags: <defaults>
</compile_context>

<pallas_src>
import functools

import jax
import jax.numpy as jnp
from jax import lax
from jax.experimental import pallas as pl
from jax.experimental.pallas import tpu as pltpu

_LANE = 128


# --------------------------------------------------------------------------- #
# Small helpers
# --------------------------------------------------------------------------- #
def _round_up(n: int, m: int) -> int:
    return -(-n // m) * m


def _vmem_capacity_bytes() -> int:
    """Physical VMEM per TensorCore (128 MiB v5e/v6e, 64 MiB v7x); safe fallback."""
    try:
        return int(pltpu.get_tpu_info().vmem_capacity_bytes)
    except Exception:
        return 64 * 1024 * 1024


def _batch_tile(batch: int) -> int:
    """Fill the MXU M dim (<=128) but keep >=2 blocks on the 'parallel' batch
    axis when B is large enough, so both v7x TensorCores get work."""
    if batch >= 256:
        return 128
    if batch >= 16:
        return min(128, _round_up(-(-batch // 2), 8))
    return batch


def _class_tile(c_pad: int) -> int:
    """Lane-dense class tile that divides the padded class dim."""
    for ct in (512, 256, 128):
        if c_pad % ct == 0:
            return min(ct, c_pad)
    return _LANE


# --------------------------------------------------------------------------- #
# Kernels
# --------------------------------------------------------------------------- #
def _dense_kernel(p_ref, w_ref, b_ref, out_ref):
    """logits tile = pooled @ W_t + b.   pooled: [bt, D], W_t: [D, ct], b: [1, ct]."""
    p = p_ref[...]
    w = w_ref[...]
    if p.dtype != w.dtype:
        p = p.astype(w.dtype)                       # keep the MXU in the narrow dtype
    out_ref[...] = (
        jnp.dot(p, w, preferred_element_type=jnp.float32) + b_ref[...]
    ).astype(out_ref.dtype)


def _accumulate_seq(x_ref, acc_ref, *, seq_len: int, block_s: int):
    """acc += sum over the seq tile; mask padded rows only on the partial last tile."""
    s = pl.program_id(1)
    last = pl.num_programs(1) - 1

    def _add(xb):
        acc_ref[...] += jnp.sum(xb.astype(jnp.float32), axis=1)

    if seq_len % block_s != 0:
        @pl.when(s < last)
        def _full():
            _add(x_ref[...])

        @pl.when(s == last)
        def _tail():
            xb = x_ref[...]
            row = lax.broadcasted_iota(jnp.int32, xb.shape, 1)
            valid = (s * block_s + row) < seq_len
            _add(jnp.where(valid, xb, jnp.zeros_like(xb)))
    else:
        _add(x_ref[...])


def _make_gap_pool_kernel(seq_len: int, block_s: int):
    """Streamed mean over the sequence axis -> pooled [bt, D] f32."""

    def kernel(x_ref, out_ref):
        s = pl.program_id(1)

        @pl.when(s == 0)
        def _init():
            out_ref[...] = jnp.zeros_like(out_ref)

        _accumulate_seq(x_ref, out_ref, seq_len=seq_len, block_s=block_s)

        @pl.when(s == pl.num_programs(1) - 1)
        def _finalize():
            out_ref[...] = out_ref[...] * jnp.float32(1.0 / seq_len)

    return kernel


def _make_gap_fused_kernel(seq_len: int, block_s: int):
    """Streamed mean over the sequence axis + fused classifier matmul."""

    def kernel(x_ref, w_ref, b_ref, out_ref, acc_ref):
        s = pl.program_id(1)

        @pl.when(s == 0)
        def _init():
            acc_ref[...] = jnp.zeros_like(acc_ref)

        _accumulate_seq(x_ref, acc_ref, seq_len=seq_len, block_s=block_s)

        @pl.when(s == pl.num_programs(1) - 1)
        def _finalize():
            pooled = acc_ref[...] * jnp.float32(1.0 / seq_len)   # mean over S, f32
            w = w_ref[...]
            if pooled.dtype != w.dtype:
                pooled = pooled.astype(w.dtype)
            out_ref[...] = (
                jnp.dot(pooled, w, preferred_element_type=jnp.float32) + b_ref[...]
            ).astype(out_ref.dtype)

    return kernel


# --------------------------------------------------------------------------- #
# pallas_call wrappers
# --------------------------------------------------------------------------- #
def _dense_logits(pooled, w_t, b_pad, vmem_limit):
    """pooled: [B, D]; w_t: [D, C_pad]; b_pad: [1, C_pad] -> [B, C_pad] f32.
    C axis is streamed in lane-dense tiles so large heads never sit resident."""
    B, D = pooled.shape
    c_pad = w_t.shape[1]
    bt = _batch_tile(B)
    ct = _class_tile(c_pad)

    return pl.pallas_call(
        _dense_kernel,
        out_shape=jax.ShapeDtypeStruct((B, c_pad), jnp.float32),
        grid=(pl.cdiv(B, bt), c_pad // ct),
        in_specs=[
            pl.BlockSpec((bt, D), lambda b, c: (b, 0)),
            pl.BlockSpec((D, ct), lambda b, c: (0, c)),   # streamed weight tiles
            pl.BlockSpec((1, ct), lambda b, c: (0, c)),
        ],
        out_specs=pl.BlockSpec((bt, ct), lambda b, c: (b, c)),   # lane-dense store
        compiler_params=pltpu.CompilerParams(
            dimension_semantics=("parallel", "parallel"),
            vmem_limit_bytes=vmem_limit),
        cost_estimate=pl.CostEstimate(
            flops=2 * B * c_pad * D,
            transcendentals=0,
            bytes_accessed=(pooled.size * pooled.dtype.itemsize
                            + w_t.size * w_t.dtype.itemsize
                            + b_pad.size * b_pad.dtype.itemsize
                            + B * c_pad * 4)),
    )(pooled, w_t, b_pad)


def _gap_logits(x3, w_t, b_pad, *, max_resident_weight_bytes, seq_tile, vmem_limit):
    """x3: [B, S, D]; returns [B, C_pad] f32 logits."""
    B, S, D = x3.shape
    c_pad = w_t.shape[1]
    weight_bytes = w_t.size * w_t.dtype.itemsize
    bias_bytes = b_pad.size * b_pad.dtype.itemsize
    bt = _batch_tile(B)

    use_fused = (weight_bytes <= max_resident_weight_bytes) and (c_pad <= 4096)

    # --- sequence tile: multiple of 8, one x tile <= ~8 MiB within the VMEM budget
    if use_fused:
        resident = 2 * (weight_bytes + bias_bytes + bt * c_pad * 4) + bt * D * 4
    else:
        resident = 2 * bt * D * 4
    budget = max(512 * 1024, min(8 * 1024 * 1024, (vmem_limit - resident) // 3))

    if seq_tile is not None:
        st = min(S, int(seq_tile))
    elif S <= 8:
        st = S
    else:
        rows = max(8, (budget // (bt * D * x3.dtype.itemsize)) // 8 * 8)
        st = min(S, rows)

    grid = (pl.cdiv(B, bt), pl.cdiv(S, st))
    x_bytes = x3.size * x3.dtype.itemsize

    if use_fused:
        return pl.pallas_call(
            _make_gap_fused_kernel(S, st),
            out_shape=jax.ShapeDtypeStruct((B, c_pad), jnp.float32),
            grid=grid,
            in_specs=[
                pl.BlockSpec((bt, st, D), lambda b, s: (b, s, 0)),   # streamed x tiles
                pl.BlockSpec((D, c_pad), lambda b, s: (0, 0)),       # resident weight
                pl.BlockSpec((1, c_pad), lambda b, s: (0, 0)),       # resident bias
            ],
            out_specs=pl.BlockSpec((bt, c_pad), lambda b, s: (b, 0)),  # lane-dense
            scratch_shapes=[pltpu.VMEM((bt, D), jnp.float32)],          # f32 accumulator
            compiler_params=pltpu.CompilerParams(
                dimension_semantics=("parallel", "arbitrary"),
                vmem_limit_bytes=vmem_limit),
            cost_estimate=pl.CostEstimate(
                flops=B * S * D + 2 * B * c_pad * D,
                transcendentals=0,
                bytes_accessed=x_bytes + weight_bytes + bias_bytes + B * c_pad * 4),
        )(x3, w_t, b_pad)

    # Large head: pool first (x streamed once), then stream the weight C-tiled.
    pooled = pl.pallas_call(
        _make_gap_pool_kernel(S, st),
        out_shape=jax.ShapeDtypeStruct((B, D), jnp.float32),
        grid=grid,
        in_specs=[pl.BlockSpec((bt, st, D), lambda b, s: (b, s, 0))],
        out_specs=pl.BlockSpec((bt, D), lambda b, s: (b, 0)),
        compiler_params=pltpu.CompilerParams(
            dimension_semantics=("parallel", "arbitrary"),
            vmem_limit_bytes=vmem_limit),
        cost_estimate=pl.CostEstimate(
            flops=B * S * D, transcendentals=0,
            bytes_accessed=x_bytes + B * D * 4),
    )(x3)
    return _dense_logits(pooled, w_t, b_pad, vmem_limit)


# --------------------------------------------------------------------------- #
# Public forward
# --------------------------------------------------------------------------- #
@functools.partial(
    jax.jit,
    static_argnames=("class_type", "training", "max_resident_weight_bytes", "seq_tile"))
def classification_forward(x, weight, bias, *, class_type: str, training: bool,
                           max_resident_weight_bytes: int = 4 * 1024 * 1024,
                           seq_tile=None):
    """x: [B, S, D] (token/gap) or [B, D]; weight: [C, D] (PyTorch layout); bias: [C]."""
    C, D = weight.shape
    c_pad = _round_up(C, _LANE)

    # One-time layout plumbing: [C, D] -> [D, C_pad]. The kernels then contract on
    # the sublane axis (no in-kernel transpose) and store lane-dense logits.
    w_t = jnp.pad(weight.T, ((0, 0), (0, c_pad - C)))
    b_pad = jnp.pad(bias, (0, c_pad - C)).reshape(1, c_pad)

    vmem_limit = (_vmem_capacity_bytes() * 3) // 4   # 96 MiB v5e/v6e, 48 MiB v7x

    if class_type == "gap" and x.ndim >= 3:
        B = x.shape[0]
        x3 = x.reshape(B, -1, D)     # mean over dims 1..ndim-2 == mean over flattened S
        logits = _gap_logits(
            x3, w_t, b_pad,
            max_resident_weight_bytes=max_resident_weight_bytes,
            seq_tile=seq_tile, vmem_limit=vmem_limit)
    else:
        if class_type == "token":
            pooled = x[:, 0]         # only B*D bytes reach the kernel
        else:
            pooled = x               # no pooling: x must already be [B, D]
        logits = _dense_logits(pooled, w_t, b_pad, vmem_limit)

    logits = logits[:, :C]           # drop lane padding
    if training:
        return logits
    # argmax on the tiny [B, C] logits — matches torch.argmax in eval mode.
    return jnp.argmax(logits, axis=-1)


# --------------------------------------------------------------------------- #
# Reference + test
# --------------------------------------------------------------------------- #
def _reference(x, weight, bias, class_type, training):
    if class_type == "token":
        p = x[:, 0]
    elif class_type == "gap":
        p = jnp.mean(x, axis=tuple(range(1, x.ndim - 1)))
    else:
        p = x
    logits = p @ weight.T + bias
    return logits if training else jnp.argmax(logits, axis=-1)


if __name__ == "__main__":
    # Small shapes consistent with the module: batch=2, seq=8, d_model=32, classes=10
    B, S, D, C = 2, 8, 32, 10
    key = jax.random.PRNGKey(0)
    kx, kw, kb = jax.random.split(key, 3)
    x = jax.random.normal(kx, (B, S, D), dtype=jnp.float32)
    bound = 1.0 / (D ** 0.5)
    weight = jax.random.uniform(kw, (C, D), minval=-bound, maxval=bound, dtype=jnp.float32)
    bias = jax.random.uniform(kb, (C,), minval=-bound, maxval=bound, dtype=jnp.float32)

    ok = True
    for class_type in ("token", "gap"):
        preds = classification_forward(x, weight, bias, class_type=class_type, training=False)
        jax.block_until_ready(preds)
        ok &= bool(jnp.array_equal(preds, _reference(x, weight, bias, class_type, False)))

        logits = classification_forward(x, weight, bias, class_type=class_type, training=True)
        jax.block_until_ready(logits)
        ok &= bool(jnp.allclose(logits, _reference(x, weight, bias, class_type, True),
                                atol=1e-5, rtol=1e-5))

    # Also exercise the streamed-weight (C-tiled) path and a partial sequence tile.
    B2, S2, D2, C2 = 4, 20, 128, 300
    kx2, kw2, kb2 = jax.random.split(jax.random.PRNGKey(1), 3)
    x2 = jax.random.normal(kx2, (B2, S2, D2), dtype=jnp.float32)
    bound2 = 1.0 / (D2 ** 0.5)
    w2 = jax.random.uniform(kw2, (C2, D2), minval=-bound2, maxval=bound2, dtype=jnp.float32)
    b2 = jax.random.uniform(kb2, (C2,), minval=-bound2, maxval=bound2, dtype=jnp.float32)
    logits2 = classification_forward(x2, w2, b2, class_type="gap", training=True,
                                     max_resident_weight_bytes=0, seq_tile=8)
    jax.block_until_ready(logits2)
    ok &= bool(jnp.allclose(logits2, _reference(x2, w2, b2, "gap", True),
                            atol=1e-3, rtol=1e-3))

    print("KERNEL_OK" if ok else "KERNEL_MISMATCH")
</pallas_src>

<mosaic_0001>
module attributes {stable_mosaic.version = 11 : i64} {
  func.func @_dense_kernel(%arg0: i32, %arg1: i32, %arg2: memref<2x32xf32, #tpu.memory_space<vmem>>, %arg3: memref<32x128xf32, #tpu.memory_space<vmem>>, %arg4: memref<1x128xf32, #tpu.memory_space<vmem>>, %arg5: memref<2x128xf32, #tpu.memory_space<vmem>>) attributes {dimension_semantics = [#tpu.dimension_semantics<parallel>, #tpu.dimension_semantics<parallel>], iteration_bounds = array<i64: 1, 1>, scalar_prefetch = 0 : i64, scratch_operands = 0 : i64, tpu.core_type = #tpu.core_type<tc>, window_params = [{transform_indices = @transform_0, window_bounds = array<i64: 2, 32>}, {transform_indices = @transform_1, window_bounds = array<i64: 32, 128>}, {transform_indices = @transform_2, window_bounds = array<i64: 1, 128>}, {transform_indices = @transform_3, window_bounds = array<i64: 2, 128>}]} {
    %c0 = arith.constant 0 : index
    %c0_0 = arith.constant 0 : index
    %0 = vector.load %arg2[%c0, %c0_0] : memref<2x32xf32, #tpu.memory_space<vmem>>, vector<2x32xf32>
    %c0_1 = arith.constant 0 : index
    %c0_2 = arith.constant 0 : index
    %1 = vector.load %arg3[%c0_1, %c0_2] : memref<32x128xf32, #tpu.memory_space<vmem>>, vector<32x128xf32>
    %cst = arith.constant dense<0.000000e+00> : vector<2x128xf32>
    %2 = tpu.matmul %0, %1, %cst {dimension_numbers = #tpu.dot_dimension_numbers<[1], [0], [0], [1], [0, 0, 1, 1], [], []>} : vector<2x32xf32>, vector<32x128xf32>, vector<2x128xf32> -> vector<2x128xf32>
    %c0_3 = arith.constant 0 : index
    %c0_4 = arith.constant 0 : index
    %3 = vector.load %arg4[%c0_3, %c0_4] : memref<1x128xf32, #tpu.memory_space<vmem>>, vector<1x128xf32>
    %4 = vector.broadcast %3 : vector<1x128xf32> to vector<2x128xf32>
    %5 = arith.addf %2, %4 : vector<2x128xf32>
    %c0_5 = arith.constant 0 : index
    %c0_6 = arith.constant 0 : index
    %6 = vector.load %arg5[%c0_5, %c0_6] : memref<2x128xf32, #tpu.memory_space<vmem>>, vector<2x128xf32>
    tpu.vector_store %arg5[%c0_5, %c0_6], %5 {strides = array<i32>} : memref<2x128xf32, #tpu.memory_space<vmem>>, vector<2x128xf32>,
    return
  }
  func.func @transform_0(%arg0: i32, %arg1: i32) -> (i32, i32) {
    %c0_i32 = arith.constant 0 : i32
    %c0_i32_0 = arith.constant 0 : i32
    return %arg0, %c0_i32 : i32, i32
  }
  func.func @transform_1(%arg0: i32, %arg1: i32) -> (i32, i32) {
    %c0_i32 = arith.constant 0 : i32
    %c0_i32_0 = arith.constant 0 : i32
    return %c0_i32, %arg1 : i32, i32
  }
  func.func @transform_2(%arg0: i32, %arg1: i32) -> (i32, i32) {
    %c0_i32 = arith.constant 0 : i32
    %c0_i32_0 = arith.constant 0 : i32
    return %c0_i32, %arg1 : i32, i32
  }
  func.func @transform_3(%arg0: i32, %arg1: i32) -> (i32, i32) {
    %c0_i32 = arith.constant 0 : i32
    return %arg0, %arg1 : i32, i32
  }
}

</mosaic_0001>

<llo_original>
// kernel: classification_forward.1
$region0: #{classification_forward.1}
  #allocation0 [shape = 'u32[]', space=smem, size = 0x4, offset = 0x4, fixed_abs, tag = 'smem constant byte address 0x4 - core index']
  #allocation1 [shape = 'u32[144,128]{1,0:T(1,128)}', space=vmem, size = 0x12000, scoped, tag = 'internal scratch']
  %s0 = inlined_call_operand.vmem [shape: f32[2,32], index: 0, kind: input, shape index: {}]
  %s1 = inlined_call_operand.vmem [shape: f32[32,128], index: 1, kind: input, shape index: {}]
  %s2 = inlined_call_operand.vmem [shape: f32[1,128], index: 2, kind: input, shape index: {}]
  %s3 = inlined_call_operand.vmem [shape: f32[2,128], index: 3, kind: output, shape index: {}]
  %s4 = sld [smem:[#allocation0]]
  $region22: #{classification_forward.1} parent=0
    _
  %s6 = ssub.s32 1, %s4
  %s7 = scalar_select 0, %s6, %s4
  // Predicated region
  $region2: #{classification_forward.1} parent=0 // pred_check
    _
  $region3: #{classification_forward.1} parent=0 // pred_check_branch
    %9 = sbr.rel (0) target = $region5
  $region4: #{classification_forward.1} parent=0 // pred_region
    _
  $region5: #{classification_forward.1} parent=0 // pred_fallthru
    _
  // Predicated region
  $region6: #{classification_forward.1} parent=0 // pred_check
    _
  $region7: #{classification_forward.1} parent=0 // pred_check_branch
    %11 = sbr.rel (0) target = $region9
  $region8: #{classification_forward.1} parent=0 // pred_region
    _
  $region9: #{classification_forward.1} parent=0 // pred_fallthru
    _
  // Predicated region
  $region10: #{classification_forward.1} parent=0 // pred_check
    _
  $region11: #{classification_forward.1} parent=0 // pred_check_branch
    %13 = sbr.rel (0) target = $region13
  $region12: #{classification_forward.1} parent=0 // pred_region
    _
  $region13: #{classification_forward.1} parent=0 // pred_fallthru
    _
  %v14 = vld [vmem:[%s0] sm:$0x3]
  %v15 = vld [vmem:[%s1] sm:$0xff]
  %v16 = vld [vmem:[%s1 + $0x8] sm:$0xff]
  %v17 = vld [vmem:[%s1 + $0x10] sm:$0xff]
  %v18 = vld [vmem:[%s1 + $0x18] sm:$0xff]
  %v19 = vld [vmem:[%s2] sm:$0x1]
  %v21 = vlaneseq
  %v22 = vshrl.u32 %v21, 7
  %v23 = vsub.s32 0, %v22
  %v24 = vrot.slane %v19, %v23
  %vm26 = vcmask 261120
  %v28 = vsel %vm26, %v14, 0
  %30 = vmatprep.subr.mxu0 0.0
  %31 = vmatpush1.msra.mxu0 %v15
  %32 = vmatprep.subr.mxu0 0.0
  %33 = vmatpush1.msra.mxu0 %v16
  %34 = vmatprep.subr.mxu0 0.0
  %35 = vmatpush1.msra.mxu0 %v17
  %36 = vmatprep.subr.mxu0 0.0
  %37 = vmatpush1.msra.mxu0 %v18
  %38 = vmatprep.subr.mxu0 0.0
  %39 = vmatpush1.msra.mxu0 0.0
  %40 = vmatprep.subr.mxu0 0.0
  %41 = vmatpush1.msra.mxu0 0.0
  %42 = vmatprep.subr.mxu0 0.0
  %43 = vmatpush1.msra.mxu0 0.0
  %44 = vmatprep.subr.mxu0 0.0
  %45 = vmatpush1.msra.mxu0 0.0
  %46 = vmatprep.subr.mxu0 0.0
  %47 = vmatpush1.msra.mxu0 0.0
  %48 = vmatprep.subr.mxu0 0.0
  %49 = vmatpush1.msra.mxu0 0.0
  %50 = vmatprep.subr.mxu0 0.0
  %51 = vmatpush1.msra.mxu0 0.0
  %52 = vmatprep.subr.mxu0 0.0
  %53 = vmatpush1.msra.mxu0 0.0
  %54 = vmatprep.subr.mxu0 0.0
  %55 = vmatpush1.msra.mxu0 0.0
  %56 = vmatprep.subr.mxu0 0.0
  %57 = vmatpush1.msra.mxu0 0.0
  %58 = vmatprep.subr.mxu0 0.0
  %59 = vmatpush1.msra.mxu0 0.0
  %60 = vmatprep.subr.mxu0 0.0
  %61 = vmatpush1.msra.mxu0 0.0
  %62 = vmatprep.subr.mxu0 0.0
  %63 = vmatpush1.msra.mxu0 0.0
  %64 = vmatprep.subr.mxu0 0.0
  %65 = vmatpush1.msra.mxu0 0.0
  %66 = vmatprep.subr.mxu0 0.0
  %67 = vmatpush1.msra.mxu0 0.0
  %68 = vmatprep.subr.mxu0 0.0
  %69 = vmatpush1.msra.mxu0 0.0
  %70 = vmatprep.subr.mxu0 0.0
  %71 = vmatpush1.msra.mxu0 0.0
  %72 = vmatprep.subr.mxu0 0.0
  %73 = vmatpush1.msra.mxu0 0.0
  %74 = vmatprep.subr.mxu0 0.0
  %75 = vmatpush1.msra.mxu0 0.0
  %76 = vmatprep.subr.mxu0 0.0
  %77 = vmatpush1.msra.mxu0 0.0
  %78 = vmatprep.subr.mxu0 0.0
  %79 = vmatpush1.msra.mxu0 0.0
  %80 = vmatprep.subr.mxu0 0.0
  %81 = vmatpush1.msra.mxu0 0.0
  %82 = vmatprep.subr.mxu0 0.0
  %83 = vmatpush1.msra.mxu0 0.0
  %84 = vmatprep.subr.mxu0 0.0
  %85 = vmatpush1.msra.mxu0 0.0
  %86 = vmatprep.subr.mxu0 0.0
  %87 = vmatpush1.msra.mxu0 0.0
  %88 = vmatprep.subr.mxu0 0.0
  %89 = vmatpush1.msra.mxu0 0.0
  %90 = vmatprep.subr.mxu0 0.0
  %91 = vmatpush1.msra.mxu0 0.0
  %92 = vmatprep.subr.mxu0 0.0
  %93 = vmatpush1.msra.mxu0 0.0
  %94 = vmatprep.mubr.f32.mxu0 0.0
  %95 = vmatmul.mubr.f32.gmra.mrb[0].mxu0 %v28
  %v96 = vpop.f32.mrb[0].mxu0
  %v97 = vadd.f32 %v24, %v96
  %v98 = vpop.f32.mrb[0].mxu0
  %99 = vdwg.mxu0
  %100 = vst [vmem:[%s3] sm:$0x3] %v97
  // Predicated region
  $region14: #{classification_forward.1} parent=0 // pred_check
    _
  $region15: #{classification_forward.1} parent=0 // pred_check_branch
    %102 = sbr.rel (0) target = $region17
  $region16: #{classification_forward.1} parent=0 // pred_region
    _
  $region17: #{classification_forward.1} parent=0 // pred_fallthru
    _
  // Predicated region
  $region18: #{classification_forward.1} parent=0 // pred_check
    _
  $region19: #{classification_forward.1} parent=0 // pred_check_branch
    %104 = sbr.rel (0) target = $region21
  $region20: #{classification_forward.1} parent=0 // pred_region
    _
  $region21: #{classification_forward.1} parent=0 // pred_fallthru
    _

</llo_original>
